<compile_context>
chip_gen: v7x
topology: tpu7x:2x2x1
jax: 0.10.0
libtpu: 0.0.40
codegen_flags: <defaults>
</compile_context>

<pallas_src>
import jax
import jax.numpy as jnp
from jax.experimental import pallas as pl
from jax.experimental.pallas import tpu as pltpu


# Layer sizes from PINNKNODE.__init__
DIMS = [2, 32, 64, 128, 64, 32, 2]


def _round_up(v, m):
    return ((v + m - 1) // m) * m


def pinnknode_kernel(x_ref,
                     w1_ref, b1_ref,
                     w2_ref, b2_ref,
                     w3_ref, b3_ref,
                     w4_ref, b4_ref,
                     w5_ref, b5_ref,
                     w6_ref, b6_ref,
                     out_ref):
    """Fused MLP forward in lane-dense (features, batch_tile) layout."""
    x = x_ref[...]                                    # (2, TM) f32

    # Layer 1 (K = 2): two broadcast FMAs on the VPU -- a 2-deep contraction
    # would waste the MXU and only add matmul round-trip latency.
    w1 = w1_ref[...]                                  # (32, 2) f32
    h = (w1[:, 0:1] * x[0:1, :]
         + w1[:, 1:2] * x[1:2, :]
         + b1_ref[...])                               # (32, TM)
    h = jnp.maximum(h, 0.0)

    def linear_relu(h, w_ref, b_ref):
        # bf16 x bf16 operands, f32 accumulate: single MXU pass per layer
        # instead of the >=3-pass f32 (bf16x3) path.
        y = jnp.dot(w_ref[...], h.astype(jnp.bfloat16),
                    preferred_element_type=jnp.float32)
        y = y + b_ref[...]                            # (out, 1) broadcasts over lanes
        return jnp.maximum(y, 0.0)

    h = linear_relu(h, w2_ref, b2_ref)                # (64,  TM)
    h = linear_relu(h, w3_ref, b3_ref)                # (128, TM)
    h = linear_relu(h, w4_ref, b4_ref)                # (64,  TM)
    h = linear_relu(h, w5_ref, b5_ref)                # (32,  TM)

    # Final layer: no ReLU.
    y = (jnp.dot(w6_ref[...], h.astype(jnp.bfloat16),
                 preferred_element_type=jnp.float32)
         + b6_ref[...])
    out_ref[...] = y.astype(out_ref.dtype)            # (2, TM)


def pinnknode_forward(x, params, *, tm=2048):
    """x: (batch, 2) f32.
    params: list of (W, b) in PyTorch layout, W (out, in), b (out,).
    Returns (batch, 2) f32, matching torch: relu(...x @ W.T + b...) with
    bf16 matmul operands / f32 accumulation for the inner layers."""
    batch = x.shape[0]

    # Lane-aligned padded batch, 128-aligned tile size.
    batch_pad = _round_up(batch, 128)
    tm = max(128, min(_round_up(tm, 128), batch_pad))
    # Even-ish split into tiles to minimize tail padding.
    n_tiles = max(1, -(-batch_pad // tm))
    tm = _round_up(-(-batch_pad // n_tiles), 128)
    # v7x megacore: keep >=2 tiles on the "parallel" axis when possible
    # (no cost on single-TC v5e/v6e).
    if n_tiles == 1 and batch_pad >= 256 and batch_pad % 256 == 0:
        tm = batch_pad // 2
        n_tiles = 2
    batch_pad = n_tiles * tm

    # Lane-dense (features, batch) layout; pad the batch tail with jnp.pad
    # (no zero-materialize + scatter).
    x_t = x.T.astype(jnp.float32)
    if batch_pad != batch:
        x_t = jnp.pad(x_t, ((0, 0), (0, batch_pad - batch)))

    flat_inputs = [x_t]
    in_specs = [pl.BlockSpec((DIMS[0], tm), lambda i: (0, i))]
    for li, (w, b) in enumerate(params):
        # Layer 1 stays f32 (VPU FMA path); layers 2-6 feed the MXU in bf16.
        w_in = w.astype(jnp.float32) if li == 0 else w.astype(jnp.bfloat16)
        flat_inputs += [w_in, b.astype(jnp.float32).reshape(-1, 1)]
        # Constant index maps -> weights/biases stay VMEM-resident across all
        # batch-tile grid steps (no re-DMA).
        in_specs += [pl.BlockSpec(w.shape, lambda i: (0, 0)),
                     pl.BlockSpec((b.shape[0], 1), lambda i: (0, 0))]
    # TODO(synk): weight/bias specs could be single-buffered
    # (pipeline_mode=pl.Buffered(1)); ~84 KB of VMEM so left at the default.

    param_bytes = sum((4 if li == 0 else 2) * w.size + 4 * b.size
                      for li, (w, b) in enumerate(params))
    flops = 2 * batch_pad * sum(a * b for a, b in zip(DIMS[:-1], DIMS[1:]))
    cost = pl.CostEstimate(
        flops=flops,
        transcendentals=0,
        bytes_accessed=4 * batch_pad * (DIMS[0] + DIMS[-1]) + param_bytes,
    )

    out_t = pl.pallas_call(
        pinnknode_kernel,
        out_shape=jax.ShapeDtypeStruct((DIMS[-1], batch_pad), jnp.float32),
        grid=(n_tiles,),
        in_specs=in_specs,
        out_specs=pl.BlockSpec((DIMS[-1], tm), lambda i: (0, i)),
        compiler_params=pltpu.CompilerParams(
            dimension_semantics=("parallel",)),
        cost_estimate=cost,
    )(*flat_inputs)

    return out_t[:, :batch].T


def init_params(key):
    """Deterministic init; PyTorch nn.Linear layout: W (out, in), b (out,)."""
    params = []
    for i in range(len(DIMS) - 1):
        fan_in, fan_out = DIMS[i], DIMS[i + 1]
        key, kw, kb = jax.random.split(key, 3)
        bound = 1.0 / jnp.sqrt(fan_in)  # nn.Linear default init range
        w = jax.random.uniform(kw, (fan_out, fan_in), jnp.float32, -bound, bound)
        b = jax.random.uniform(kb, (fan_out,), jnp.float32, -bound, bound)
        params.append((w, b))
    return params


def reference_forward(x, params):
    """Plain-JAX f32 reference matching the PyTorch forward exactly."""
    h = x
    for i, (w, b) in enumerate(params):
        h = h @ w.T + b
        if i < len(params) - 1:
            h = jnp.maximum(h, 0.0)
    return h


# TODO(synk): ODEF.forward_with_grad / flatten_parameters are autograd and
# parameter bookkeeping, not part of the forward pass; not implemented here.

if __name__ == "__main__":
    key = jax.random.PRNGKey(0)
    key, kx1, kx2 = jax.random.split(key, 3)
    params = init_params(key)

    # bf16 matmul operands (f32 accumulate) -> loosened tolerance vs f32 ref.
    tol = dict(atol=5e-2, rtol=5e-2)

    # Small single-tile case.
    batch = 8
    x = jax.random.normal(kx1, (batch, 2), jnp.float32)
    out = jax.block_until_ready(pinnknode_forward(x, params))
    ref = reference_forward(x, params)
    assert out.shape == (batch, 2)
    assert jnp.allclose(out, ref, **tol)

    # Multi-tile case (3 grid steps of tm=128) exercising the parallel grid
    # and the batch-tail padding path.
    batch2 = 300
    x2 = jax.random.normal(kx2, (batch2, 2), jnp.float32)
    out2 = jax.block_until_ready(pinnknode_forward(x2, params, tm=128))
    ref2 = reference_forward(x2, params)
    assert out2.shape == (batch2, 2)
    assert jnp.allclose(out2, ref2, **tol)

    print("KERNEL_OK")
</pallas_src>

<mosaic_0001>
module attributes {stable_mosaic.version = 11 : i64} {
  func.func @pinnknode_kernel(%arg0: i32, %arg1: memref<2x128xf32, #tpu.memory_space<vmem>>, %arg2: memref<32x2xf32, #tpu.memory_space<vmem>>, %arg3: memref<32x1xf32, #tpu.memory_space<vmem>>, %arg4: memref<64x32xbf16, #tpu.memory_space<vmem>>, %arg5: memref<64x1xf32, #tpu.memory_space<vmem>>, %arg6: memref<128x64xbf16, #tpu.memory_space<vmem>>, %arg7: memref<128x1xf32, #tpu.memory_space<vmem>>, %arg8: memref<64x128xbf16, #tpu.memory_space<vmem>>, %arg9: memref<64x1xf32, #tpu.memory_space<vmem>>, %arg10: memref<32x64xbf16, #tpu.memory_space<vmem>>, %arg11: memref<32x1xf32, #tpu.memory_space<vmem>>, %arg12: memref<2x32xbf16, #tpu.memory_space<vmem>>, %arg13: memref<2x1xf32, #tpu.memory_space<vmem>>, %arg14: memref<2x128xf32, #tpu.memory_space<vmem>>) attributes {dimension_semantics = [#tpu.dimension_semantics<parallel>], iteration_bounds = array<i64: 1>, scalar_prefetch = 0 : i64, scratch_operands = 0 : i64, tpu.core_type = #tpu.core_type<tc>, window_params = [{transform_indices = @transform_0, window_bounds = array<i64: 2, 128>}, {pipeline_mode = #tpu.pipeline_mode<synchronous>, transform_indices = @transform_1, window_bounds = array<i64: 32, 2>}, {pipeline_mode = #tpu.pipeline_mode<synchronous>, transform_indices = @transform_2, window_bounds = array<i64: 32, 1>}, {pipeline_mode = #tpu.pipeline_mode<synchronous>, transform_indices = @transform_3, window_bounds = array<i64: 64, 32>}, {pipeline_mode = #tpu.pipeline_mode<synchronous>, transform_indices = @transform_4, window_bounds = array<i64: 64, 1>}, {pipeline_mode = #tpu.pipeline_mode<synchronous>, transform_indices = @transform_5, window_bounds = array<i64: 128, 64>}, {pipeline_mode = #tpu.pipeline_mode<synchronous>, transform_indices = @transform_6, window_bounds = array<i64: 128, 1>}, {pipeline_mode = #tpu.pipeline_mode<synchronous>, transform_indices = @transform_7, window_bounds = array<i64: 64, 128>}, {pipeline_mode = #tpu.pipeline_mode<synchronous>, transform_indices = @transform_8, window_bounds = array<i64: 64, 1>}, {pipeline_mode = #tpu.pipeline_mode<synchronous>, transform_indices = @transform_9, window_bounds = array<i64: 32, 64>}, {pipeline_mode = #tpu.pipeline_mode<synchronous>, transform_indices = @transform_10, window_bounds = array<i64: 32, 1>}, {pipeline_mode = #tpu.pipeline_mode<synchronous>, transform_indices = @transform_11, window_bounds = array<i64: 2, 32>}, {pipeline_mode = #tpu.pipeline_mode<synchronous>, transform_indices = @transform_12, window_bounds = array<i64: 2, 1>}, {transform_indices = @transform_13, window_bounds = array<i64: 2, 128>}]} {
    %c0 = arith.constant 0 : index
    %c0_0 = arith.constant 0 : index
    %0 = vector.load %arg1[%c0, %c0_0] : memref<2x128xf32, #tpu.memory_space<vmem>>, vector<2x128xf32>
    %c0_1 = arith.constant 0 : index
    %c0_2 = arith.constant 0 : index
    %1 = vector.load %arg2[%c0_1, %c0_2] : memref<32x2xf32, #tpu.memory_space<vmem>>, vector<32x2xf32>
    %2 = vector.extract_strided_slice %1 {offsets = [0, 0], sizes = [32, 1], strides = [1, 1]} : vector<32x2xf32> to vector<32x1xf32>
    %3 = vector.extract_strided_slice %0 {offsets = [0, 0], sizes = [1, 128], strides = [1, 1]} : vector<2x128xf32> to vector<1x128xf32>
    %4 = vector.broadcast %2 : vector<32x1xf32> to vector<32x128xf32>
    %5 = vector.broadcast %3 : vector<1x128xf32> to vector<32x128xf32>
    %6 = arith.mulf %4, %5 : vector<32x128xf32>
    %7 = vector.extract_strided_slice %1 {offsets = [0, 1], sizes = [32, 1], strides = [1, 1]} : vector<32x2xf32> to vector<32x1xf32>
    %8 = vector.extract_strided_slice %0 {offsets = [1, 0], sizes = [1, 128], strides = [1, 1]} : vector<2x128xf32> to vector<1x128xf32>
    %9 = vector.broadcast %7 : vector<32x1xf32> to vector<32x128xf32>
    %10 = vector.broadcast %8 : vector<1x128xf32> to vector<32x128xf32>
    %11 = arith.mulf %9, %10 : vector<32x128xf32>
    %12 = arith.addf %6, %11 : vector<32x128xf32>
    %c0_3 = arith.constant 0 : index
    %c0_4 = arith.constant 0 : index
    %13 = vector.load %arg3[%c0_3, %c0_4] : memref<32x1xf32, #tpu.memory_space<vmem>>, vector<32x1xf32>
    %14 = vector.broadcast %13 : vector<32x1xf32> to vector<32x128xf32>
    %15 = arith.addf %12, %14 : vector<32x128xf32>
    %cst = arith.constant 0.000000e+00 : f32
    %16 = vector.broadcast %cst : f32 to vector<32x128xf32>
    %17 = arith.maximumf %15, %16 : vector<32x128xf32>
    %c0_5 = arith.constant 0 : index
    %c0_6 = arith.constant 0 : index
    %18 = vector.load %arg4[%c0_5, %c0_6] : memref<64x32xbf16, #tpu.memory_space<vmem>>, vector<64x32xbf16>
    %19 = arith.truncf %17 : vector<32x128xf32> to vector<32x128xbf16>
    %cst_7 = arith.constant dense<0.000000e+00> : vector<64x128xf32>
    %20 = tpu.matmul %18, %19, %cst_7 {dimension_numbers = #tpu.dot_dimension_numbers<[1], [0], [0], [1], [0, 0, 1, 1], [], []>} : vector<64x32xbf16>, vector<32x128xbf16>, vector<64x128xf32> -> vector<64x128xf32>
    %c0_8 = arith.constant 0 : index
    %c0_9 = arith.constant 0 : index
    %21 = vector.load %arg5[%c0_8, %c0_9] : memref<64x1xf32, #tpu.memory_space<vmem>>, vector<64x1xf32>
    %22 = vector.broadcast %21 : vector<64x1xf32> to vector<64x128xf32>
    %23 = arith.addf %20, %22 : vector<64x128xf32>
    %cst_10 = arith.constant 0.000000e+00 : f32
    %24 = vector.broadcast %cst_10 : f32 to vector<64x128xf32>
    %25 = arith.maximumf %23, %24 : vector<64x128xf32>
    %c0_11 = arith.constant 0 : index
    %c0_12 = arith.constant 0 : index
    %26 = vector.load %arg6[%c0_11, %c0_12] : memref<128x64xbf16, #tpu.memory_space<vmem>>, vector<128x64xbf16>
    %27 = arith.truncf %25 : vector<64x128xf32> to vector<64x128xbf16>
    %cst_13 = arith.constant dense<0.000000e+00> : vector<128x128xf32>
    %28 = tpu.matmul %26, %27, %cst_13 {dimension_numbers = #tpu.dot_dimension_numbers<[1], [0], [0], [1], [0, 0, 1, 1], [], []>} : vector<128x64xbf16>, vector<64x128xbf16>, vector<128x128xf32> -> vector<128x128xf32>
    %c0_14 = arith.constant 0 : index
    %c0_15 = arith.constant 0 : index
    %29 = vector.load %arg7[%c0_14, %c0_15] : memref<128x1xf32, #tpu.memory_space<vmem>>, vector<128x1xf32>
    %30 = vector.broadcast %29 : vector<128x1xf32> to vector<128x128xf32>
    %31 = arith.addf %28, %30 : vector<128x128xf32>
    %cst_16 = arith.constant 0.000000e+00 : f32
    %32 = vector.broadcast %cst_16 : f32 to vector<128x128xf32>
    %33 = arith.maximumf %31, %32 : vector<128x128xf32>
    %c0_17 = arith.constant 0 : index
    %c0_18 = arith.constant 0 : index
    %34 = vector.load %arg8[%c0_17, %c0_18] : memref<64x128xbf16, #tpu.memory_space<vmem>>, vector<64x128xbf16>
    %35 = arith.truncf %33 : vector<128x128xf32> to vector<128x128xbf16>
    %cst_19 = arith.constant dense<0.000000e+00> : vector<64x128xf32>
    %36 = tpu.matmul %34, %35, %cst_19 {dimension_numbers = #tpu.dot_dimension_numbers<[1], [0], [0], [1], [0, 0, 1, 1], [], []>} : vector<64x128xbf16>, vector<128x128xbf16>, vector<64x128xf32> -> vector<64x128xf32>
    %c0_20 = arith.constant 0 : index
    %c0_21 = arith.constant 0 : index
    %37 = vector.load %arg9[%c0_20, %c0_21] : memref<64x1xf32, #tpu.memory_space<vmem>>, vector<64x1xf32>
    %38 = vector.broadcast %37 : vector<64x1xf32> to vector<64x128xf32>
    %39 = arith.addf %36, %38 : vector<64x128xf32>
    %cst_22 = arith.constant 0.000000e+00 : f32
    %40 = vector.broadcast %cst_22 : f32 to vector<64x128xf32>
    %41 = arith.maximumf %39, %40 : vector<64x128xf32>
    %c0_23 = arith.constant 0 : index
    %c0_24 = arith.constant 0 : index
    %42 = vector.load %arg10[%c0_23, %c0_24] : memref<32x64xbf16, #tpu.memory_space<vmem>>, vector<32x64xbf16>
    %43 = arith.truncf %41 : vector<64x128xf32> to vector<64x128xbf16>
    %cst_25 = arith.constant dense<0.000000e+00> : vector<32x128xf32>
    %44 = tpu.matmul %42, %43, %cst_25 {dimension_numbers = #tpu.dot_dimension_numbers<[1], [0], [0], [1], [0, 0, 1, 1], [], []>} : vector<32x64xbf16>, vector<64x128xbf16>, vector<32x128xf32> -> vector<32x128xf32>
    %c0_26 = arith.constant 0 : index
    %c0_27 = arith.constant 0 : index
    %45 = vector.load %arg11[%c0_26, %c0_27] : memref<32x1xf32, #tpu.memory_space<vmem>>, vector<32x1xf32>
    %46 = vector.broadcast %45 : vector<32x1xf32> to vector<32x128xf32>
    %47 = arith.addf %44, %46 : vector<32x128xf32>
    %cst_28 = arith.constant 0.000000e+00 : f32
    %48 = vector.broadcast %cst_28 : f32 to vector<32x128xf32>
    %49 = arith.maximumf %47, %48 : vector<32x128xf32>
    %c0_29 = arith.constant 0 : index
    %c0_30 = arith.constant 0 : index
    %50 = vector.load %arg12[%c0_29, %c0_30] : memref<2x32xbf16, #tpu.memory_space<vmem>>, vector<2x32xbf16>
    %51 = arith.truncf %49 : vector<32x128xf32> to vector<32x128xbf16>
    %cst_31 = arith.constant dense<0.000000e+00> : vector<2x128xf32>
    %52 = tpu.matmul %50, %51, %cst_31 {dimension_numbers = #tpu.dot_dimension_numbers<[1], [0], [0], [1], [0, 0, 1, 1], [], []>} : vector<2x32xbf16>, vector<32x128xbf16>, vector<2x128xf32> -> vector<2x128xf32>
    %c0_32 = arith.constant 0 : index
    %c0_33 = arith.constant 0 : index
    %53 = vector.load %arg13[%c0_32, %c0_33] : memref<2x1xf32, #tpu.memory_space<vmem>>, vector<2x1xf32>
    %54 = vector.broadcast %53 : vector<2x1xf32> to vector<2x128xf32>
    %55 = arith.addf %52, %54 : vector<2x128xf32>
    %c0_34 = arith.constant 0 : index
    %c0_35 = arith.constant 0 : index
    %56 = vector.load %arg14[%c0_34, %c0_35] : memref<2x128xf32, #tpu.memory_space<vmem>>, vector<2x128xf32>
    tpu.vector_store %arg14[%c0_34, %c0_35], %55 {strides = array<i32>} : memref<2x128xf32, #tpu.memory_space<vmem>>, vector<2x128xf32>,
    return
  }
  func.func @transform_0(%arg0: i32) -> (i32, i32) {
    %c0_i32 = arith.constant 0 : i32
    %c0_i32_0 = arith.constant 0 : i32
    return %c0_i32, %arg0 : i32, i32
  }
  func.func @transform_1(%arg0: i32) -> (i32, i32) {
    %c0_i32 = arith.constant 0 : i32
    %c0_i32_0 = arith.constant 0 : i32
    %c0_i32_1 = arith.constant 0 : i32
    return %c0_i32, %c0_i32_0 : i32, i32
  }
  func.func @transform_2(%arg0: i32) -> (i32, i32) {
    %c0_i32 = arith.constant 0 : i32
    %c0_i32_0 = arith.constant 0 : i32
    %c0_i32_1 = arith.constant 0 : i32
    return %c0_i32, %c0_i32_0 : i32, i32
  }
  func.func @transform_3(%arg0: i32) -> (i32, i32) {
    %c0_i32 = arith.constant 0 : i32
    %c0_i32_0 = arith.constant 0 : i32
    %c0_i32_1 = arith.constant 0 : i32
    return %c0_i32, %c0_i32_0 : i32, i32
  }
  func.func @transform_4(%arg0: i32) -> (i32, i32) {
    %c0_i32 = arith.constant 0 : i32
    %c0_i32_0 = arith.constant 0 : i32
    %c0_i32_1 = arith.constant 0 : i32
    return %c0_i32, %c0_i32_0 : i32, i32
  }
  func.func @transform_5(%arg0: i32) -> (i32, i32) {
    %c0_i32 = arith.constant 0 : i32
    %c0_i32_0 = arith.constant 0 : i32
    %c0_i32_1 = arith.constant 0 : i32
    return %c0_i32, %c0_i32_0 : i32, i32
  }
  func.func @transform_6(%arg0: i32) -> (i32, i32) {
    %c0_i32 = arith.constant 0 : i32
    %c0_i32_0 = arith.constant 0 : i32
    %c0_i32_1 = arith.constant 0 : i32
    return %c0_i32, %c0_i32_0 : i32, i32
  }
  func.func @transform_7(%arg0: i32) -> (i32, i32) {
    %c0_i32 = arith.constant 0 : i32
    %c0_i32_0 = arith.constant 0 : i32
    %c0_i32_1 = arith.constant 0 : i32
    return %c0_i32, %c0_i32_0 : i32, i32
  }
  func.func @transform_8(%arg0: i32) -> (i32, i32) {
    %c0_i32 = arith.constant 0 : i32
    %c0_i32_0 = arith.constant 0 : i32
    %c0_i32_1 = arith.constant 0 : i32
    return %c0_i32, %c0_i32_0 : i32, i32
  }
  func.func @transform_9(%arg0: i32) -> (i32, i32) {
    %c0_i32 = arith.constant 0 : i32
    %c0_i32_0 = arith.constant 0 : i32
    %c0_i32_1 = arith.constant 0 : i32
    return %c0_i32, %c0_i32_0 : i32, i32
  }
  func.func @transform_10(%arg0: i32) -> (i32, i32) {
    %c0_i32 = arith.constant 0 : i32
    %c0_i32_0 = arith.constant 0 : i32
    %c0_i32_1 = arith.constant 0 : i32
    return %c0_i32, %c0_i32_0 : i32, i32
  }
  func.func @transform_11(%arg0: i32) -> (i32, i32) {
    %c0_i32 = arith.constant 0 : i32
    %c0_i32_0 = arith.constant 0 : i32
    %c0_i32_1 = arith.constant 0 : i32
    return %c0_i32, %c0_i32_0 : i32, i32
  }
  func.func @transform_12(%arg0: i32) -> (i32, i32) {
    %c0_i32 = arith.constant 0 : i32
    %c0_i32_0 = arith.constant 0 : i32
    %c0_i32_1 = arith.constant 0 : i32
    return %c0_i32, %c0_i32_0 : i32, i32
  }
  func.func @transform_13(%arg0: i32) -> (i32, i32) {
    %c0_i32 = arith.constant 0 : i32
    %c0_i32_0 = arith.constant 0 : i32
    return %c0_i32, %arg0 : i32, i32
  }
}

</mosaic_0001>

<llo_original>
// kernel: tpu_custom_call.1
$region0: #{tpu_custom_call.1}
  #allocation0 [shape = 'u32[]', space=smem, size = 0x4, offset = 0x4, fixed_abs, tag = 'smem constant byte address 0x4 - core index']
  #allocation1 [shape = 'u32[144,128]{1,0:T(1,128)}', space=vmem, size = 0x12000, scoped, tag = 'internal scratch']
  %s0 = inlined_call_operand.vmem [shape: f32[2,128], index: 0, kind: input, shape index: {}]
  %s1 = inlined_call_operand.vmem [shape: f32[32,2], index: 1, kind: input, shape index: {}]
  %s2 = inlined_call_operand.vmem [shape: f32[32,1], index: 2, kind: input, shape index: {}]
  %s3 = inlined_call_operand.vmem [shape: bf16[64,32], index: 3, kind: input, shape index: {}]
  %s4 = inlined_call_operand.vmem [shape: f32[64,1], index: 4, kind: input, shape index: {}]
  %s5 = inlined_call_operand.vmem [shape: bf16[128,64], index: 5, kind: input, shape index: {}]
  %s6 = inlined_call_operand.vmem [shape: f32[128,1], index: 6, kind: input, shape index: {}]
  %s7 = inlined_call_operand.vmem [shape: bf16[64,128], index: 7, kind: input, shape index: {}]
  %s8 = inlined_call_operand.vmem [shape: f32[64,1], index: 8, kind: input, shape index: {}]
  %s9 = inlined_call_operand.vmem [shape: bf16[32,64], index: 9, kind: input, shape index: {}]
  %s10 = inlined_call_operand.vmem [shape: f32[32,1], index: 10, kind: input, shape index: {}]
  %s11 = inlined_call_operand.vmem [shape: bf16[2,32], index: 11, kind: input, shape index: {}]
  %s12 = inlined_call_operand.vmem [shape: f32[2,1], index: 12, kind: input, shape index: {}]
  %s13 = inlined_call_operand.hbm [shape: f32[2,128], index: 13, kind: output, shape index: {}]
  %s14 = sld [smem:[#allocation0]]
  $region62: #{tpu_custom_call.1} parent=0
    _
  %s16 = ssub.s32 1, %s14
  %s17 = scalar_select 0, %s16, %s14
  $region1: #{tpu_custom_call.1} parent=0
    #allocation2 [shape = 'u8[1024]{0}', space=vmem, size = 0x400, scoped, tag = 'output window, operand 0, single buffered']
    #allocation3 [shape = 's32[1]{0}', space=sflag, size = 0x4, scoped, tag = 'scoped memory for tpu_custom_call.1']
    %18 = vsyncpa [#allocation3], 0
    // Predicated region
    $region2: #{tpu_custom_call.1} parent=1 // pred_check
      _
    $region3: #{tpu_custom_call.1} parent=1 // pred_check_branch
      %20 = sbr.rel (0) target = $region5
    $region4: #{tpu_custom_call.1} parent=1 // pred_region
      _
    $region5: #{tpu_custom_call.1} parent=1 // pred_fallthru
      _
    // Predicated region
    $region6: #{tpu_custom_call.1} parent=1 // pred_check
      _
    $region7: #{tpu_custom_call.1} parent=1 // pred_check_branch
      %22 = sbr.rel (0) target = $region9
    $region8: #{tpu_custom_call.1} parent=1 // pred_region
      _
    $region9: #{tpu_custom_call.1} parent=1 // pred_fallthru
      _
    // Predicated region
    $region10: #{tpu_custom_call.1} parent=1 // pred_check
      _
    $region11: #{tpu_custom_call.1} parent=1 // pred_check_branch
      %24 = sbr.rel (0) target = $region13
    $region12: #{tpu_custom_call.1} parent=1 // pred_region
      _
    $region13: #{tpu_custom_call.1} parent=1 // pred_fallthru
      _
    // Predicated region
    $region14: #{tpu_custom_call.1} parent=1 // pred_check
      _
    $region15: #{tpu_custom_call.1} parent=1 // pred_check_branch
      %26 = sbr.rel (0) target = $region17
    $region16: #{tpu_custom_call.1} parent=1 // pred_region
      _
    $region17: #{tpu_custom_call.1} parent=1 // pred_fallthru
      _
    // Predicated region
    $region18: #{tpu_custom_call.1} parent=1 // pred_check
      _
    $region19: #{tpu_custom_call.1} parent=1 // pred_check_branch
      %28 = sbr.rel (0) target = $region21
    $region20: #{tpu_custom_call.1} parent=1 // pred_region
      _
    $region21: #{tpu_custom_call.1} parent=1 // pred_fallthru
      _
    // Predicated region
    $region22: #{tpu_custom_call.1} parent=1 // pred_check
      _
    $region23: #{tpu_custom_call.1} parent=1 // pred_check_branch
      %30 = sbr.rel (0) target = $region25
    $region24: #{tpu_custom_call.1} parent=1 // pred_region
      _
    $region25: #{tpu_custom_call.1} parent=1 // pred_fallthru
      _
    // Predicated region
    $region26: #{tpu_custom_call.1} parent=1 // pred_check
      _
    $region27: #{tpu_custom_call.1} parent=1 // pred_check_branch
      %32 = sbr.rel (0) target = $region29
    $region28: #{tpu_custom_call.1} parent=1 // pred_region
      _
    $region29: #{tpu_custom_call.1} parent=1 // pred_fallthru
      _
    // Predicated region
    $region30: #{tpu_custom_call.1} parent=1 // pred_check
      _
    $region31: #{tpu_custom_call.1} parent=1 // pred_check_branch
      %34 = sbr.rel (0) target = $region33
    $region32: #{tpu_custom_call.1} parent=1 // pred_region
      _
    $region33: #{tpu_custom_call.1} parent=1 // pred_fallthru
      _
    // Predicated region
    $region34: #{tpu_custom_call.1} parent=1 // pred_check
      _
    $region35: #{tpu_custom_call.1} parent=1 // pred_check_branch
      %36 = sbr.rel (0) target = $region37
    $region36: #{tpu_custom_call.1} parent=1 // pred_region
      _
    $region37: #{tpu_custom_call.1} parent=1 // pred_fallthru
      _
    // Predicated region
    $region38: #{tpu_custom_call.1} parent=1 // pred_check
      _
    $region39: #{tpu_custom_call.1} parent=1 // pred_check_branch
      %38 = sbr.rel (0) target = $region41
    $region40: #{tpu_custom_call.1} parent=1 // pred_region
      _
    $region41: #{tpu_custom_call.1} parent=1 // pred_fallthru
      _
    // Predicated region
    $region42: #{tpu_custom_call.1} parent=1 // pred_check
      _
    $region43: #{tpu_custom_call.1} parent=1 // pred_check_branch
      %40 = sbr.rel (0) target = $region45
    $region44: #{tpu_custom_call.1} parent=1 // pred_region
      _
    $region45: #{tpu_custom_call.1} parent=1 // pred_fallthru
      _
    // Predicated region
    $region46: #{tpu_custom_call.1} parent=1 // pred_check
      _
    $region47: #{tpu_custom_call.1} parent=1 // pred_check_branch
      %42 = sbr.rel (0) target = $region49
    $region48: #{tpu_custom_call.1} parent=1 // pred_region
      _
    $region49: #{tpu_custom_call.1} parent=1 // pred_fallthru
      _
    // Predicated region
    $region50: #{tpu_custom_call.1} parent=1 // pred_check
      _
    $region51: #{tpu_custom_call.1} parent=1 // pred_check_branch
      %44 = sbr.rel (0) target = $region53
    $region52: #{tpu_custom_call.1} parent=1 // pred_region
      _
    $region53: #{tpu_custom_call.1} parent=1 // pred_fallthru
      _
    %v46 = vld [vmem:[%s0] sm:$0x3]
    %v47 = vld [vmem:[%s1] sm:$0xff]
    %v48 = vld [vmem:[%s1 + $0x8] sm:$0xff]
    %v49 = vld [vmem:[%s1 + $0x10] sm:$0xff]
    %v50 = vld [vmem:[%s1 + $0x18] sm:$0xff]
    %52 = vset.pattern.permute.xlu0 0
    %53 = vperm.xlu0 %52, %v47
    %v54 = vpop.permute.xlu0 %53
    %57 = vset.pattern.permute.xlu0 0
    %58 = vperm.xlu0 %57, %v48
    %v59 = vpop.permute.xlu0 %58
    %62 = vset.pattern.permute.xlu0 0
    %63 = vperm.xlu0 %62, %v49
    %v64 = vpop.permute.xlu0 %63
    %67 = vset.pattern.permute.xlu0 0
    %68 = vperm.xlu0 %67, %v50
    %v69 = vpop.permute.xlu0 %68
    %v71 = vlaneseq
    %v72 = vshrl.u32 %v71, 7
    %v73 = vsub.s32 0, %v72
    %v74 = vrot.slane %v46, %v73
    %v75 = vmul.f32 %v54, %v74
    %v76 = vmul.f32 %v59, %v74
    %v77 = vmul.f32 %v64, %v74
    %v78 = vmul.f32 %v69, %v74
    %79 = vset.pattern.permute.xlu0 1
    %80 = vperm.xlu0 %79, %v47
    %v81 = vpop.permute.xlu0 %80
    %83 = vset.pattern.permute.xlu0 1
    %84 = vperm.xlu0 %83, %v48
    %v85 = vpop.permute.xlu0 %84
    %87 = vset.pattern.permute.xlu0 1
    %88 = vperm.xlu0 %87, %v49
    %v89 = vpop.permute.xlu0 %88
    %91 = vset.pattern.permute.xlu0 1
    %92 = vperm.xlu0 %91, %v50
    %v93 = vpop.permute.xlu0 %92
    %v95 = vlaneseq
    %v96 = vshrl.u32 %v95, 7
    %v97 = vsub.s32 1, %v96
    %v98 = vrot.slane %v46, %v97
    %v99 = vmul.f32 %v81, %v98
    %v100 = vmul.f32 %v85, %v98
    %v101 = vmul.f32 %v89, %v98
    %v102 = vmul.f32 %v93, %v98
    %v103 = vadd.f32 %v75, %v99
    %v104 = vadd.f32 %v76, %v100
    %v105 = vadd.f32 %v77, %v101
    %v106 = vadd.f32 %v78, %v102
    %v107 = vld [vmem:[%s2] sm:$0xff]
    %v108 = vld [vmem:[%s2 + $0x8] sm:$0xff]
    %v109 = vld [vmem:[%s2 + $0x10] sm:$0xff]
    %v110 = vld [vmem:[%s2 + $0x18] sm:$0xff]
    %112 = vset.pattern.permute.xlu0 0
    %113 = vperm.xlu0 %112, %v107
    %v114 = vpop.permute.xlu0 %113
    %117 = vset.pattern.permute.xlu0 0
    %118 = vperm.xlu0 %117, %v108
    %v119 = vpop.permute.xlu0 %118
    %122 = vset.pattern.permute.xlu0 0
    %123 = vperm.xlu0 %122, %v109
    %v124 = vpop.permute.xlu0 %123
    %127 = vset.pattern.permute.xlu0 0
    %128 = vperm.xlu0 %127, %v110
    %v129 = vpop.permute.xlu0 %128
    %v131 = vadd.f32 %v103, %v114
    %v132 = vadd.f32 %v104, %v119
    %v133 = vadd.f32 %v105, %v124
    %v134 = vadd.f32 %v106, %v129
    %v135 = vmax.f32 %v131, 0.0
    %v136 = vmax.f32 %v132, 0.0
    %v137 = vmax.f32 %v133, 0.0
    %v138 = vmax.f32 %v134, 0.0
    %v139 = vld [vmem:[%s3] sm:$0xf]
    %v140 = vld [vmem:[%s3 + $0x4] sm:$0xf]
    %v141 = vld [vmem:[%s3 + $0x8] sm:$0xf]
    %v142 = vld [vmem:[%s3 + $0xc] sm:$0xf]
    %v143 = vld [vmem:[%s3 + $0x10] sm:$0xf]
    %v144 = vld [vmem:[%s3 + $0x14] sm:$0xf]
    %v145 = vld [vmem:[%s3 + $0x18] sm:$0xf]
    %v146 = vld [vmem:[%s3 + $0x1c] sm:$0xf]
    %v147 = vpack.c.bf16 %v136, %v135
    %v148 = vpack.c.bf16 %v138, %v137
    %v149 = vld [vmem:[%s4] sm:$0xff]
    %v150 = vld [vmem:[%s4 + $0x8] sm:$0xff]
    %v151 = vld [vmem:[%s4 + $0x10] sm:$0xff]
    %v152 = vld [vmem:[%s4 + $0x18] sm:$0xff]
    %v153 = vld [vmem:[%s4 + $0x20] sm:$0xff]
    %v154 = vld [vmem:[%s4 + $0x28] sm:$0xff]
    %v155 = vld [vmem:[%s4 + $0x30] sm:$0xff]
    %v156 = vld [vmem:[%s4 + $0x38] sm:$0xff]
    %158 = vset.pattern.permute.xlu0 0
    %159 = vperm.xlu0 %158, %v149
    %v160 = vpop.permute.xlu0 %159
    %163 = vset.pattern.permute.xlu0 0
    %164 = vperm.xlu0 %163, %v150
    %v165 = vpop.permute.xlu0 %164
    %168 = vset.pattern.permute.xlu0 0
    %169 = vperm.xlu0 %168, %v151
    %v170 = vpop.permute.xlu0 %169
    %173 = vset.pattern.permute.xlu0 0
    %174 = vperm.xlu0 %173, %v152
    %v175 = vpop.permute.xlu0 %174
    %178 = vset.pattern.permute.xlu0 0
    %179 = vperm.xlu0 %178, %v153
    %v180 = vpop.permute.xlu0 %179
    %183 = vset.pattern.permute.xlu0 0
    %184 = vperm.xlu0 %183, %v154
    %v185 = vpop.permute.xlu0 %184
    %188 = vset.pattern.permute.xlu0 0
    %189 = vperm.xlu0 %188, %v155
    %v190 = vpop.permute.xlu0 %189
    %193 = vset.pattern.permute.xlu0 0
    %194 = vperm.xlu0 %193, %v156
    %v195 = vpop.permute.xlu0 %194
    %v205 = vunpack.c.l.b16 %v139
    %v206 = vunpack.c.l.b16 %v140
    %v207 = vunpack.c.l.b16 %v141
    %v208 = vunpack.c.l.b16 %v142
    %v209 = vunpack.c.l.b16 %v143
    %v210 = vunpack.c.l.b16 %v144
    %v211 = vunpack.c.l.b16 %v145
    %v212 = vunpack.c.l.b16 %v146
    %v213 = vpack.c.b16 %v206, %v205
    %v214 = vpack.c.b16 %v208, %v207
    %v215 = vpack.c.b16 %v210, %v209
    %v216 = vpack.c.b16 %v212, %v211
    %vm217 = vcmask 261120
    %v219 = vsel %vm217, %v213, 0
    %v222 = vsel %vm217, %v214, 0
    %v225 = vsel %vm217, %v215, 0
    %v228 = vsel %vm217, %v216, 0
    %230 = vmatprep.subr.bf16.mxu0 0
    %231 = vmatpush1.bf16.msra.mxu0 %v147
    %232 = vmatprep.subr.bf16.mxu0 0
    %233 = vmatpush1.bf16.msra.mxu0 %v148
    %234 = vmatprep.subr.bf16.mxu0 0
    %235 = vmatpush1.bf16.msra.mxu0 0
    %236 = vmatprep.subr.bf16.mxu0 0
    %237 = vmatpush1.bf16.msra.mxu0 0
    %238 = vmatprep.subr.bf16.mxu0 0
    %239 = vmatpush1.bf16.msra.mxu0 0
    %240 = vmatprep.subr.bf16.mxu0 0
    %241 = vmatpush1.bf16.msra.mxu0 0
    %242 = vmatprep.subr.bf16.mxu0 0
    %243 = vmatpush1.bf16.msra.mxu0 0
    %244 = vmatprep.subr.bf16.mxu0 0
    %245 = vmatpush1.bf16.msra.mxu0 0
    %246 = vmatprep.subr.bf16.mxu0 0
    %247 = vmatpush1.bf16.msra.mxu0 0
    %248 = vmatprep.subr.bf16.mxu0 0
    %249 = vmatpush1.bf16.msra.mxu0 0
    %250 = vmatprep.subr.bf16.mxu0 0
    %251 = vmatpush1.bf16.msra.mxu0 0
    %252 = vmatprep.subr.bf16.mxu0 0
    %253 = vmatpush1.bf16.msra.mxu0 0
    %254 = vmatprep.subr.bf16.mxu0 0
    %255 = vmatpush1.bf16.msra.mxu0 0
    %256 = vmatprep.subr.bf16.mxu0 0
    %257 = vmatpush1.bf16.msra.mxu0 0
    %258 = vmatprep.subr.bf16.mxu0 0
    %259 = vmatpush1.bf16.msra.mxu0 0
    %260 = vmatprep.subr.bf16.mxu0 0
    %261 = vmatpush1.bf16.msra.mxu0 0
    %262 = vmatprep.mubr.bf16.mxu0 0
    %263 = vmatmul.mubr.bf16.gmra.mrb[0].mxu0 %v219
    %v264 = vpop.f32.mrb[0].mxu0
    %v265 = vadd.f32 %v160, %v264
    %v266 = vpop.f32.mrb[0].mxu0
    %v267 = vpop.f32.mrb[0].mxu0
    %v268 = vadd.f32 %v165, %v267
    %v269 = vpop.f32.mrb[0].mxu0
    %270 = vmatprep.mubr.bf16.mxu0 0
    %271 = vmatmul.mubr.bf16.gmra.mrb[0].mxu0 %v222
    %v272 = vpop.f32.mrb[0].mxu0
    %v273 = vadd.f32 %v170, %v272
    %v274 = vpop.f32.mrb[0].mxu0
    %v275 = vpop.f32.mrb[0].mxu0
    %v276 = vadd.f32 %v175, %v275
    %v277 = vpop.f32.mrb[0].mxu0
    %278 = vmatprep.mubr.bf16.mxu0 0
    %279 = vmatmul.mubr.bf16.gmra.mrb[0].mxu0 %v225
    %v280 = vpop.f32.mrb[0].mxu0
    %v281 = vadd.f32 %v180, %v280
    %v282 = vpop.f32.mrb[0].mxu0
    %v283 = vpop.f32.mrb[0].mxu0
    %v284 = vadd.f32 %v185, %v283
    %v285 = vpop.f32.mrb[0].mxu0
    %286 = vmatprep.mubr.bf16.mxu0 0
    %287 = vmatmul.mubr.bf16.gmra.mrb[0].mxu0 %v228
    %v288 = vpop.f32.mrb[0].mxu0
    %v289 = vadd.f32 %v190, %v288
    %v290 = vpop.f32.mrb[0].mxu0
    %v291 = vpop.f32.mrb[0].mxu0
    %v292 = vadd.f32 %v195, %v291
    %v293 = vpop.f32.mrb[0].mxu0
    %294 = vdwg.mxu0
    %v295 = vmax.f32 %v265, 0.0
    %v296 = vmax.f32 %v268, 0.0
    %v297 = vmax.f32 %v273, 0.0
    %v298 = vmax.f32 %v276, 0.0
    %v299 = vmax.f32 %v281, 0.0
    %v300 = vmax.f32 %v284, 0.0
    %v301 = vmax.f32 %v289, 0.0
    %v302 = vmax.f32 %v292, 0.0
    %v303 = vld [vmem:[%s5] sm:$0xf]
    %v304 = vld [vmem:[%s5 + $0x4] sm:$0xf]
    %v305 = vld [vmem:[%s5 + $0x8] sm:$0xf]
    %v306 = vld [vmem:[%s5 + $0xc] sm:$0xf]
    %v307 = vld [vmem:[%s5 + $0x10] sm:$0xf]
    %v308 = vld [vmem:[%s5 + $0x14] sm:$0xf]
    %v309 = vld [vmem:[%s5 + $0x18] sm:$0xf]
    %v310 = vld [vmem:[%s5 + $0x1c] sm:$0xf]
    %v311 = vld [vmem:[%s5 + $0x20] sm:$0xf]
    %v312 = vld [vmem:[%s5 + $0x24] sm:$0xf]
    %v313 = vld [vmem:[%s5 + $0x28] sm:$0xf]
    %v314 = vld [vmem:[%s5 + $0x2c] sm:$0xf]
    %v315 = vld [vmem:[%s5 + $0x30] sm:$0xf]
    %v316 = vld [vmem:[%s5 + $0x34] sm:$0xf]
    %v317 = vld [vmem:[%s5 + $0x38] sm:$0xf]
    %v318 = vld [vmem:[%s5 + $0x3c] sm:$0xf]
    %v319 = vpack.c.bf16 %v296, %v295
    %v320 = vpack.c.bf16 %v298, %v297
    %v321 = vpack.c.bf16 %v300, %v299
    %v322 = vpack.c.bf16 %v302, %v301
    %v323 = vld [vmem:[%s6] sm:$0xff]
    %v324 = vld [vmem:[%s6 + $0x8] sm:$0xff]
    %v325 = vld [vmem:[%s6 + $0x10] sm:$0xff]
    %v326 = vld [vmem:[%s6 + $0x18] sm:$0xff]
    %v327 = vld [vmem:[%s6 + $0x20] sm:$0xff]
    %v328 = vld [vmem:[%s6 + $0x28] sm:$0xff]
    %v329 = vld [vmem:[%s6 + $0x30] sm:$0xff]
    %v330 = vld [vmem:[%s6 + $0x38] sm:$0xff]
    %v331 = vld [vmem:[%s6 + $0x40] sm:$0xff]
    %v332 = vld [vmem:[%s6 + $0x48] sm:$0xff]
    %v333 = vld [vmem:[%s6 + $0x50] sm:$0xff]
    %v334 = vld [vmem:[%s6 + $0x58] sm:$0xff]
    %v335 = vld [vmem:[%s6 + $0x60] sm:$0xff]
    %v336 = vld [vmem:[%s6 + $0x68] sm:$0xff]
    %v337 = vld [vmem:[%s6 + $0x70] sm:$0xff]
    %v338 = vld [vmem:[%s6 + $0x78] sm:$0xff]
    %340 = vset.pattern.permute.xlu0 0
    %341 = vperm.xlu0 %340, %v323
    %v342 = vpop.permute.xlu0 %341
    %345 = vset.pattern.permute.xlu0 0
    %346 = vperm.xlu0 %345, %v324
    %v347 = vpop.permute.xlu0 %346
    %350 = vset.pattern.permute.xlu0 0
    %351 = vperm.xlu0 %350, %v325
    %v352 = vpop.permute.xlu0 %351
    %355 = vset.pattern.permute.xlu0 0
    %356 = vperm.xlu0 %355, %v326
    %v357 = vpop.permute.xlu0 %356
    %360 = vset.pattern.permute.xlu0 0
    %361 = vperm.xlu0 %360, %v327
    %v362 = vpop.permute.xlu0 %361
    %365 = vset.pattern.permute.xlu0 0
    %366 = vperm.xlu0 %365, %v328
    %v367 = vpop.permute.xlu0 %366
    %370 = vset.pattern.permute.xlu0 0
    %371 = vperm.xlu0 %370, %v329
    %v372 = vpop.permute.xlu0 %371
    %375 = vset.pattern.permute.xlu0 0
    %376 = vperm.xlu0 %375, %v330
    %v377 = vpop.permute.xlu0 %376
    %380 = vset.pattern.permute.xlu0 0
    %381 = vperm.xlu0 %380, %v331
    %v382 = vpop.permute.xlu0 %381
    %385 = vset.pattern.permute.xlu0 0
    %386 = vperm.xlu0 %385, %v332
    %v387 = vpop.permute.xlu0 %386
    %390 = vset.pattern.permute.xlu0 0
    %391 = vperm.xlu0 %390, %v333
    %v392 = vpop.permute.xlu0 %391
    %395 = vset.pattern.permute.xlu0 0
    %396 = vperm.xlu0 %395, %v334
    %v397 = vpop.permute.xlu0 %396
    %400 = vset.pattern.permute.xlu0 0
    %401 = vperm.xlu0 %400, %v335
    %v402 = vpop.permute.xlu0 %401
    %405 = vset.pattern.permute.xlu0 0
    %406 = vperm.xlu0 %405, %v336
    %v407 = vpop.permute.xlu0 %406
    %410 = vset.pattern.permute.xlu0 0
    %411 = vperm.xlu0 %410, %v337
    %v412 = vpop.permute.xlu0 %411
    %415 = vset.pattern.permute.xlu0 0
    %416 = vperm.xlu0 %415, %v338
    %v417 = vpop.permute.xlu0 %416
    %v435 = vunpack.c.l.b16 %v303
    %v436 = vunpack.c.l.b16 %v304
    %v437 = vunpack.c.l.b16 %v305
    %v438 = vunpack.c.l.b16 %v306
    %v439 = vunpack.c.l.b16 %v307
    %v440 = vunpack.c.l.b16 %v308
    %v441 = vunpack.c.l.b16 %v309
    %v442 = vunpack.c.l.b16 %v310
    %v443 = vunpack.c.l.b16 %v311
    %v444 = vunpack.c.l.b16 %v312
    %v445 = vunpack.c.l.b16 %v313
    %v446 = vunpack.c.l.b16 %v314
    %v447 = vunpack.c.l.b16 %v315
    %v448 = vunpack.c.l.b16 %v316
    %v449 = vunpack.c.l.b16 %v317
    %v450 = vunpack.c.l.b16 %v318
    %v451 = vpack.c.b16 %v436, %v435
    %v452 = vpack.c.b16 %v438, %v437
    %v453 = vpack.c.b16 %v440, %v439
    %v454 = vpack.c.b16 %v442, %v441
    %v455 = vpack.c.b16 %v444, %v443
    %v456 = vpack.c.b16 %v446, %v445
    %v457 = vpack.c.b16 %v448, %v447
    %v458 = vpack.c.b16 %v450, %v449
    %vm459 = vcmask 523264
    %v461 = vsel %vm459, %v451, 0
    %v464 = vsel %vm459, %v452, 0
    %v467 = vsel %vm459, %v453, 0
    %v470 = vsel %vm459, %v454, 0
    %v473 = vsel %vm459, %v455, 0
    %v476 = vsel %vm459, %v456, 0
    %v479 = vsel %vm459, %v457, 0
    %v482 = vsel %vm459, %v458, 0
    %484 = vmatprep.subr.bf16.mxu0 0
    %485 = vmatpush1.bf16.msra.mxu0 %v319
    %486 = vmatprep.subr.bf16.mxu0 0
    %487 = vmatpush1.bf16.msra.mxu0 %v320
    %488 = vmatprep.subr.bf16.mxu0 0
    %489 = vmatpush1.bf16.msra.mxu0 %v321
    %490 = vmatprep.subr.bf16.mxu0 0
    %491 = vmatpush1.bf16.msra.mxu0 %v322
    %492 = vmatprep.subr.bf16.mxu0 0
    %493 = vmatpush1.bf16.msra.mxu0 0
    %494 = vmatprep.subr.bf16.mxu0 0
    %495 = vmatpush1.bf16.msra.mxu0 0
    %496 = vmatprep.subr.bf16.mxu0 0
    %497 = vmatpush1.bf16.msra.mxu0 0
    %498 = vmatprep.subr.bf16.mxu0 0
    %499 = vmatpush1.bf16.msra.mxu0 0
    %500 = vmatprep.subr.bf16.mxu0 0
    %501 = vmatpush1.bf16.msra.mxu0 0
    %502 = vmatprep.subr.bf16.mxu0 0
    %503 = vmatpush1.bf16.msra.mxu0 0
    %504 = vmatprep.subr.bf16.mxu0 0
    %505 = vmatpush1.bf16.msra.mxu0 0
    %506 = vmatprep.subr.bf16.mxu0 0
    %507 = vmatpush1.bf16.msra.mxu0 0
    %508 = vmatprep.subr.bf16.mxu0 0
    %509 = vmatpush1.bf16.msra.mxu0 0
    %510 = vmatprep.subr.bf16.mxu0 0
    %511 = vmatpush1.bf16.msra.mxu0 0
    %512 = vmatprep.subr.bf16.mxu0 0
    %513 = vmatpush1.bf16.msra.mxu0 0
    %514 = vmatprep.subr.bf16.mxu0 0
    %515 = vmatpush1.bf16.msra.mxu0 0
    %516 = vmatprep.mubr.bf16.mxu0 0
    %517 = vmatmul.mubr.bf16.gmra.mrb[0].mxu0 %v461
    %v518 = vpop.f32.mrb[0].mxu0
    %v519 = vadd.f32 %v342, %v518
    %v520 = vpop.f32.mrb[0].mxu0
    %v521 = vpop.f32.mrb[0].mxu0
    %v522 = vadd.f32 %v347, %v521
    %v523 = vpop.f32.mrb[0].mxu0
    %524 = vmatprep.mubr.bf16.mxu0 0
    %525 = vmatmul.mubr.bf16.gmra.mrb[0].mxu0 %v464
    %v526 = vpop.f32.mrb[0].mxu0
    %v527 = vadd.f32 %v352, %v526
    %v528 = vpop.f32.mrb[0].mxu0
    %v529 = vpop.f32.mrb[0].mxu0
    %v530 = vadd.f32 %v357, %v529
    %v531 = vpop.f32.mrb[0].mxu0
    %532 = vmatprep.mubr.bf16.mxu0 0
    %533 = vmatmul.mubr.bf16.gmra.mrb[0].mxu0 %v467
    %v534 = vpop.f32.mrb[0].mxu0
    %v535 = vadd.f32 %v362, %v534
    %v536 = vpop.f32.mrb[0].mxu0
    %v537 = vpop.f32.mrb[0].mxu0
    %v538 = vadd.f32 %v367, %v537
    %v539 = vpop.f32.mrb[0].mxu0
    %540 = vmatprep.mubr.bf16.mxu0 0
    %541 = vmatmul.mubr.bf16.gmra.mrb[0].mxu0 %v470
    %v542 = vpop.f32.mrb[0].mxu0
    %v543 = vadd.f32 %v372, %v542
    %v544 = vpop.f32.mrb[0].mxu0
    %v545 = vpop.f32.mrb[0].mxu0
    %v546 = vadd.f32 %v377, %v545
    %v547 = vpop.f32.mrb[0].mxu0
    %548 = vmatprep.mubr.bf16.mxu0 0
    %549 = vmatmul.mubr.bf16.gmra.mrb[0].mxu0 %v473
    %v550 = vpop.f32.mrb[0].mxu0
    %v551 = vadd.f32 %v382, %v550
    %v552 = vpop.f32.mrb[0].mxu0
    %v553 = vpop.f32.mrb[0].mxu0
    %v554 = vadd.f32 %v387, %v553
    %v555 = vpop.f32.mrb[0].mxu0
    %556 = vmatprep.mubr.bf16.mxu0 0
    %557 = vmatmul.mubr.bf16.gmra.mrb[0].mxu0 %v476
    %v558 = vpop.f32.mrb[0].mxu0
    %v559 = vadd.f32 %v392, %v558
    %v560 = vpop.f32.mrb[0].mxu0
    %v561 = vpop.f32.mrb[0].mxu0
    %v562 = vadd.f32 %v397, %v561
    %v563 = vpop.f32.mrb[0].mxu0
    %564 = vmatprep.mubr.bf16.mxu0 0
    %565 = vmatmul.mubr.bf16.gmra.mrb[0].mxu0 %v479
    %v566 = vpop.f32.mrb[0].mxu0
    %v567 = vadd.f32 %v402, %v566
    %v568 = vpop.f32.mrb[0].mxu0
    %v569 = vpop.f32.mrb[0].mxu0
    %v570 = vadd.f32 %v407, %v569
    %v571 = vpop.f32.mrb[0].mxu0
    %572 = vmatprep.mubr.bf16.mxu0 0
    %573 = vmatmul.mubr.bf16.gmra.mrb[0].mxu0 %v482
    %v574 = vpop.f32.mrb[0].mxu0
    %v575 = vadd.f32 %v412, %v574
    %v576 = vpop.f32.mrb[0].mxu0
    %v577 = vpop.f32.mrb[0].mxu0
    %v578 = vadd.f32 %v417, %v577
    %v579 = vpop.f32.mrb[0].mxu0
    %580 = vdwg.mxu0
    %v581 = vmax.f32 %v519, 0.0
    %v582 = vmax.f32 %v522, 0.0
    %v583 = vmax.f32 %v527, 0.0
    %v584 = vmax.f32 %v530, 0.0
    %v585 = vmax.f32 %v535, 0.0
    %v586 = vmax.f32 %v538, 0.0
    %v587 = vmax.f32 %v543, 0.0
    %v588 = vmax.f32 %v546, 0.0
    %v589 = vmax.f32 %v551, 0.0
    %v590 = vmax.f32 %v554, 0.0
    %v591 = vmax.f32 %v559, 0.0
    %v592 = vmax.f32 %v562, 0.0
    %v593 = vmax.f32 %v567, 0.0
    %v594 = vmax.f32 %v570, 0.0
    %v595 = vmax.f32 %v575, 0.0
    %v596 = vmax.f32 %v578, 0.0
    %v597 = vld [vmem:[%s7] sm:$0xf]
    %v598 = vld [vmem:[%s7 + $0x4] sm:$0xf]
    %v599 = vld [vmem:[%s7 + $0x8] sm:$0xf]
    %v600 = vld [vmem:[%s7 + $0xc] sm:$0xf]
    %v601 = vld [vmem:[%s7 + $0x10] sm:$0xf]
    %v602 = vld [vmem:[%s7 + $0x14] sm:$0xf]
    %v603 = vld [vmem:[%s7 + $0x18] sm:$0xf]
    %v604 = vld [vmem:[%s7 + $0x1c] sm:$0xf]
    %v605 = vpack.c.bf16 %v582, %v581
    %v606 = vpack.c.bf16 %v584, %v583
    %v607 = vpack.c.bf16 %v586, %v585
    %v608 = vpack.c.bf16 %v588, %v587
    %v609 = vpack.c.bf16 %v590, %v589
    %v610 = vpack.c.bf16 %v592, %v591
    %v611 = vpack.c.bf16 %v594, %v593
    %v612 = vpack.c.bf16 %v596, %v595
    %v613 = vld [vmem:[%s8] sm:$0xff]
    %v614 = vld [vmem:[%s8 + $0x8] sm:$0xff]
    %v615 = vld [vmem:[%s8 + $0x10] sm:$0xff]
    %v616 = vld [vmem:[%s8 + $0x18] sm:$0xff]
    %v617 = vld [vmem:[%s8 + $0x20] sm:$0xff]
    %v618 = vld [vmem:[%s8 + $0x28] sm:$0xff]
    %v619 = vld [vmem:[%s8 + $0x30] sm:$0xff]
    %v620 = vld [vmem:[%s8 + $0x38] sm:$0xff]
    %622 = vset.pattern.permute.xlu0 0
    %623 = vperm.xlu0 %622, %v613
    %v624 = vpop.permute.xlu0 %623
    %627 = vset.pattern.permute.xlu0 0
    %628 = vperm.xlu0 %627, %v614
    %v629 = vpop.permute.xlu0 %628
    %632 = vset.pattern.permute.xlu0 0
    %633 = vperm.xlu0 %632, %v615
    %v634 = vpop.permute.xlu0 %633
    %637 = vset.pattern.permute.xlu0 0
    %638 = vperm.xlu0 %637, %v616
    %v639 = vpop.permute.xlu0 %638
    %642 = vset.pattern.permute.xlu0 0
    %643 = vperm.xlu0 %642, %v617
    %v644 = vpop.permute.xlu0 %643
    %647 = vset.pattern.permute.xlu0 0
    %648 = vperm.xlu0 %647, %v618
    %v649 = vpop.permute.xlu0 %648
    %652 = vset.pattern.permute.xlu0 0
    %653 = vperm.xlu0 %652, %v619
    %v654 = vpop.permute.xlu0 %653
    %657 = vset.pattern.permute.xlu0 0
    %658 = vperm.xlu0 %657, %v620
    %v659 = vpop.permute.xlu0 %658
    %v669 = vunpack.c.l.b16 %v597
    %v670 = vunpack.c.l.b16 %v598
    %v671 = vunpack.c.l.b16 %v599
    %v672 = vunpack.c.l.b16 %v600
    %v673 = vunpack.c.l.b16 %v601
    %v674 = vunpack.c.l.b16 %v602
    %v675 = vunpack.c.l.b16 %v603
    %v676 = vunpack.c.l.b16 %v604
    %v677 = vpack.c.b16 %v670, %v669
    %v678 = vpack.c.b16 %v672, %v671
    %v679 = vpack.c.b16 %v674, %v673
    %v680 = vpack.c.b16 %v676, %v675
    %685 = vmatprep.subr.bf16.mxu0 0
    %686 = vmatpush1.bf16.msra.mxu0 %v605
    %687 = vmatprep.subr.bf16.mxu0 0
    %688 = vmatpush1.bf16.msra.mxu0 %v606
    %689 = vmatprep.subr.bf16.mxu0 0
    %690 = vmatpush1.bf16.msra.mxu0 %v607
    %691 = vmatprep.subr.bf16.mxu0 0
    %692 = vmatpush1.bf16.msra.mxu0 %v608
    %693 = vmatprep.subr.bf16.mxu0 0
    %694 = vmatpush1.bf16.msra.mxu0 %v609
    %695 = vmatprep.subr.bf16.mxu0 0
    %696 = vmatpush1.bf16.msra.mxu0 %v610
    %697 = vmatprep.subr.bf16.mxu0 0
    %698 = vmatpush1.bf16.msra.mxu0 %v611
    %699 = vmatprep.subr.bf16.mxu0 0
    %700 = vmatpush1.bf16.msra.mxu0 %v612
    %701 = vmatprep.subr.bf16.mxu0 0
    %702 = vmatpush1.bf16.msra.mxu0 0
    %703 = vmatprep.subr.bf16.mxu0 0
    %704 = vmatpush1.bf16.msra.mxu0 0
    %705 = vmatprep.subr.bf16.mxu0 0
    %706 = vmatpush1.bf16.msra.mxu0 0
    %707 = vmatprep.subr.bf16.mxu0 0
    %708 = vmatpush1.bf16.msra.mxu0 0
    %709 = vmatprep.subr.bf16.mxu0 0
    %710 = vmatpush1.bf16.msra.mxu0 0
    %711 = vmatprep.subr.bf16.mxu0 0
    %712 = vmatpush1.bf16.msra.mxu0 0
    %713 = vmatprep.subr.bf16.mxu0 0
    %714 = vmatpush1.bf16.msra.mxu0 0
    %715 = vmatprep.subr.bf16.mxu0 0
    %716 = vmatpush1.bf16.msra.mxu0 0
    %717 = vmatprep.mubr.bf16.mxu0 0
    %718 = vmatmul.mubr.bf16.gmra.mrb[0].mxu0 %v677
    %v719 = vpop.f32.mrb[0].mxu0
    %v720 = vadd.f32 %v624, %v719
    %v721 = vpop.f32.mrb[0].mxu0
    %v722 = vpop.f32.mrb[0].mxu0
    %v723 = vadd.f32 %v629, %v722
    %v724 = vpop.f32.mrb[0].mxu0
    %725 = vmatprep.mubr.bf16.mxu0 0
    %726 = vmatmul.mubr.bf16.gmra.mrb[0].mxu0 %v678
    %v727 = vpop.f32.mrb[0].mxu0
    %v728 = vadd.f32 %v634, %v727
    %v729 = vpop.f32.mrb[0].mxu0
    %v730 = vpop.f32.mrb[0].mxu0
    %v731 = vadd.f32 %v639, %v730
    %v732 = vpop.f32.mrb[0].mxu0
    %733 = vmatprep.mubr.bf16.mxu0 0
    %734 = vmatmul.mubr.bf16.gmra.mrb[0].mxu0 %v679
    %v735 = vpop.f32.mrb[0].mxu0
    %v736 = vadd.f32 %v644, %v735
    %v737 = vpop.f32.mrb[0].mxu0
    %v738 = vpop.f32.mrb[0].mxu0
    %v739 = vadd.f32 %v649, %v738
    %v740 = vpop.f32.mrb[0].mxu0
    %741 = vmatprep.mubr.bf16.mxu0 0
    %742 = vmatmul.mubr.bf16.gmra.mrb[0].mxu0 %v680
    %v743 = vpop.f32.mrb[0].mxu0
    %v744 = vadd.f32 %v654, %v743
    %v745 = vpop.f32.mrb[0].mxu0
    %v746 = vpop.f32.mrb[0].mxu0
    %v747 = vadd.f32 %v659, %v746
    %v748 = vpop.f32.mrb[0].mxu0
    %749 = vdwg.mxu0
    %v750 = vmax.f32 %v720, 0.0
    %v751 = vmax.f32 %v723, 0.0
    %v752 = vmax.f32 %v728, 0.0
    %v753 = vmax.f32 %v731, 0.0
    %v754 = vmax.f32 %v736, 0.0
    %v755 = vmax.f32 %v739, 0.0
    %v756 = vmax.f32 %v744, 0.0
    %v757 = vmax.f32 %v747, 0.0
    %v758 = vld [vmem:[%s9] sm:$0xf]
    %v759 = vld [vmem:[%s9 + $0x4] sm:$0xf]
    %v760 = vld [vmem:[%s9 + $0x8] sm:$0xf]
    %v761 = vld [vmem:[%s9 + $0xc] sm:$0xf]
    %v762 = vpack.c.bf16 %v751, %v750
    %v763 = vpack.c.bf16 %v753, %v752
    %v764 = vpack.c.bf16 %v755, %v754
    %v765 = vpack.c.bf16 %v757, %v756
    %v766 = vld [vmem:[%s10] sm:$0xff]
    %v767 = vld [vmem:[%s10 + $0x8] sm:$0xff]
    %v768 = vld [vmem:[%s10 + $0x10] sm:$0xff]
    %v769 = vld [vmem:[%s10 + $0x18] sm:$0xff]
    %771 = vset.pattern.permute.xlu0 0
    %772 = vperm.xlu0 %771, %v766
    %v773 = vpop.permute.xlu0 %772
    %776 = vset.pattern.permute.xlu0 0
    %777 = vperm.xlu0 %776, %v767
    %v778 = vpop.permute.xlu0 %777
    %781 = vset.pattern.permute.xlu0 0
    %782 = vperm.xlu0 %781, %v768
    %v783 = vpop.permute.xlu0 %782
    %786 = vset.pattern.permute.xlu0 0
    %787 = vperm.xlu0 %786, %v769
    %v788 = vpop.permute.xlu0 %787
    %v794 = vunpack.c.l.b16 %v758
    %v795 = vunpack.c.l.b16 %v759
    %v796 = vunpack.c.l.b16 %v760
    %v797 = vunpack.c.l.b16 %v761
    %v798 = vpack.c.b16 %v795, %v794
    %v799 = vpack.c.b16 %v797, %v796
    %v801 = vsel %vm459, %v798, 0
    %v804 = vsel %vm459, %v799, 0
    %806 = vmatprep.subr.bf16.mxu0 0
    %807 = vmatpush1.bf16.msra.mxu0 %v762
    %808 = vmatprep.subr.bf16.mxu0 0
    %809 = vmatpush1.bf16.msra.mxu0 %v763
    %810 = vmatprep.subr.bf16.mxu0 0
    %811 = vmatpush1.bf16.msra.mxu0 %v764
    %812 = vmatprep.subr.bf16.mxu0 0
    %813 = vmatpush1.bf16.msra.mxu0 %v765
    %814 = vmatprep.subr.bf16.mxu0 0
    %815 = vmatpush1.bf16.msra.mxu0 0
    %816 = vmatprep.subr.bf16.mxu0 0
    %817 = vmatpush1.bf16.msra.mxu0 0
    %818 = vmatprep.subr.bf16.mxu0 0
    %819 = vmatpush1.bf16.msra.mxu0 0
    %820 = vmatprep.subr.bf16.mxu0 0
    %821 = vmatpush1.bf16.msra.mxu0 0
    %822 = vmatprep.subr.bf16.mxu0 0
    %823 = vmatpush1.bf16.msra.mxu0 0
    %824 = vmatprep.subr.bf16.mxu0 0
    %825 = vmatpush1.bf16.msra.mxu0 0
    %826 = vmatprep.subr.bf16.mxu0 0
    %827 = vmatpush1.bf16.msra.mxu0 0
    %828 = vmatprep.subr.bf16.mxu0 0
    %829 = vmatpush1.bf16.msra.mxu0 0
    %830 = vmatprep.subr.bf16.mxu0 0
    %831 = vmatpush1.bf16.msra.mxu0 0
    %832 = vmatprep.subr.bf16.mxu0 0
    %833 = vmatpush1.bf16.msra.mxu0 0
    %834 = vmatprep.subr.bf16.mxu0 0
    %835 = vmatpush1.bf16.msra.mxu0 0
    %836 = vmatprep.subr.bf16.mxu0 0
    %837 = vmatpush1.bf16.msra.mxu0 0
    %838 = vmatprep.mubr.bf16.mxu0 0
    %839 = vmatmul.mubr.bf16.gmra.mrb[0].mxu0 %v801
    %v840 = vpop.f32.mrb[0].mxu0
    %v841 = vadd.f32 %v773, %v840
    %v842 = vpop.f32.mrb[0].mxu0
    %v843 = vpop.f32.mrb[0].mxu0
    %v844 = vadd.f32 %v778, %v843
    %v845 = vpop.f32.mrb[0].mxu0
    %846 = vmatprep.mubr.bf16.mxu0 0
    %847 = vmatmul.mubr.bf16.gmra.mrb[0].mxu0 %v804
    %v848 = vpop.f32.mrb[0].mxu0
    %v849 = vadd.f32 %v783, %v848
    %v850 = vpop.f32.mrb[0].mxu0
    %v851 = vpop.f32.mrb[0].mxu0
    %v852 = vadd.f32 %v788, %v851
    %v853 = vpop.f32.mrb[0].mxu0
    %854 = vdwg.mxu0
    %v855 = vmax.f32 %v841, 0.0
    %v856 = vmax.f32 %v844, 0.0
    %v857 = vmax.f32 %v849, 0.0
    %v858 = vmax.f32 %v852, 0.0
    %v859 = vld [vmem:[%s11] sm:$0x1]
    %v860 = vpack.c.bf16 %v856, %v855
    %v861 = vpack.c.bf16 %v858, %v857
    %v862 = vld [vmem:[%s12] sm:$0x3]
    %864 = vset.pattern.permute.xlu0 0
    %865 = vperm.xlu0 %864, %v862
    %v866 = vpop.permute.xlu0 %865
    %v869 = vsel %vm217, %v859, 0
    %871 = vmatprep.subr.bf16.mxu0 0
    %872 = vmatpush1.bf16.msra.mxu0 %v860
    %873 = vmatprep.subr.bf16.mxu0 0
    %874 = vmatpush1.bf16.msra.mxu0 %v861
    %875 = vmatprep.subr.bf16.mxu0 0
    %876 = vmatpush1.bf16.msra.mxu0 0
    %877 = vmatprep.subr.bf16.mxu0 0
    %878 = vmatpush1.bf16.msra.mxu0 0
    %879 = vmatprep.subr.bf16.mxu0 0
    %880 = vmatpush1.bf16.msra.mxu0 0
    %881 = vmatprep.subr.bf16.mxu0 0
    %882 = vmatpush1.bf16.msra.mxu0 0
    %883 = vmatprep.subr.bf16.mxu0 0
    %884 = vmatpush1.bf16.msra.mxu0 0
    %885 = vmatprep.subr.bf16.mxu0 0
    %886 = vmatpush1.bf16.msra.mxu0 0
    %887 = vmatprep.subr.bf16.mxu0 0
    %888 = vmatpush1.bf16.msra.mxu0 0
    %889 = vmatprep.subr.bf16.mxu0 0
    %890 = vmatpush1.bf16.msra.mxu0 0
    %891 = vmatprep.subr.bf16.mxu0 0
    %892 = vmatpush1.bf16.msra.mxu0 0
    %893 = vmatprep.subr.bf16.mxu0 0
    %894 = vmatpush1.bf16.msra.mxu0 0
    %895 = vmatprep.subr.bf16.mxu0 0
    %896 = vmatpush1.bf16.msra.mxu0 0
    %897 = vmatprep.subr.bf16.mxu0 0
    %898 = vmatpush1.bf16.msra.mxu0 0
    %899 = vmatprep.subr.bf16.mxu0 0
    %900 = vmatpush1.bf16.msra.mxu0 0
    %901 = vmatprep.subr.bf16.mxu0 0
    %902 = vmatpush1.bf16.msra.mxu0 0
    %903 = vmatprep.mubr.bf16.mxu0 0
    %904 = vmatmul.mubr.bf16.gmra.mrb[0].mxu0 %v869
    %v905 = vpop.f32.mrb[0].mxu0
    %v906 = vadd.f32 %v866, %v905
    %v907 = vpop.f32.mrb[0].mxu0
    %v908 = vpop.f32.mrb[0].mxu0
    %v909 = vpop.f32.mrb[0].mxu0
    %910 = vdwg.mxu0
    %911 = vst [vmem:[#allocation2] sm:$0x3] %v906
    // Predicated region
    $region54: #{tpu_custom_call.1} parent=1 // pred_check
      _
    $region55: #{tpu_custom_call.1} parent=1 // pred_check_branch
      %913 = sbr.rel (0) target = $region57
    $region56: #{tpu_custom_call.1} parent=1 // pred_region
      %s915 = ssub.s32 32, 32
      %916 = vsyncadd [#allocation3], %s915
      %s918 = sshll.u32 [#allocation2], 4
      %s919 = int_to_ptr.vmem [resolvable:$true] %s918
      %921 = dma.vmem_to_hbm [thread:$0]  %s919, 32, %s13, [#allocation3]
    $region57: #{tpu_custom_call.1} parent=1 // pred_fallthru
      _
    // Predicated region
    $region58: #{tpu_custom_call.1} parent=1 // pred_check
      _
    $region59: #{tpu_custom_call.1} parent=1 // pred_check_branch
      %923 = sbr.rel (0) target = $region61
    $region60: #{tpu_custom_call.1} parent=1 // pred_region
      %924 = dma.done [#allocation3], 32
    $region61: #{tpu_custom_call.1} parent=1 // pred_fallthru
      _
    %925 = vsyncpa [#allocation3], 1

</llo_original>
